<compile_context>
chip_gen: v6e
topology: v6e:2x2x1
jax: 0.10.0
libtpu: 0.0.40
codegen_flags: <defaults>
</compile_context>

<pallas_src>
import functools
import math

import jax
import jax.numpy as jnp
from jax.experimental import pallas as pl
from jax.experimental.pallas import tpu as pltpu


def _slice_len(s, size):
    start, stop, step = s.indices(size)
    return max(0, (stop - start + step - 1) // step)


def _pad_kernel(x_ref, o_ref, *, pads, spatial_in, value, fuse_w):
    """Write every output element exactly once.

    * Pad slabs of the leading spatial dims are full-lane-width fills.
    * If `fuse_w`, the last-dim (lane) padding is fused into the interior row
      store: rows of width W_out are assembled in registers and stored with a
      single lane-dense, unmasked store.
    * Otherwise the original onion path is used: narrow W strips + a
      lane-offset interior copy.
    """
    nsp = len(spatial_in)
    lead = (slice(None), slice(None))           # (N_blk, C_blk) leading dims
    dtype = o_ref.dtype
    lo_w, hi_w = pads[-1]

    def fill(idx):
        shape = tuple(_slice_len(s, d) for s, d in zip(idx, o_ref.shape))
        o_ref[idx] = jnp.full(shape, value, dtype=dtype)

    # Onion decomposition of the border: for spatial dim d, the low/high pad
    # slabs span the full extent of later dims but only the interior of
    # earlier dims, so no output element is written twice.  These slabs are
    # full width in the lane dim -> lane-dense stores.  The last-dim strips
    # are only emitted on the non-fused path.
    for d in range(nsp):
        if fuse_w and d == nsp - 1:
            continue
        lo, hi = pads[d]
        inner_prefix = tuple(
            slice(pads[e][0], pads[e][0] + spatial_in[e]) for e in range(d)
        )
        suffix = tuple(slice(None) for _ in range(d + 1, nsp))
        if lo > 0:
            fill(lead + inner_prefix + (slice(0, lo),) + suffix)
        if hi > 0:
            start = lo + spatial_in[d]
            fill(lead + inner_prefix + (slice(start, start + hi),) + suffix)

    interior_prefix = lead + tuple(
        slice(l, l + s) for s, (l, _) in zip(spatial_in[:-1], pads[:-1])
    )
    x = x_ref[...]

    if fuse_w and (lo_w > 0 or hi_w > 0):
        # Build full-width rows [value*lo | x | value*hi] in registers (the
        # lane shifts happen on the XLU, off the store path) and write them
        # with a single unmasked, lane-dense store.
        parts = []
        if lo_w > 0:
            parts.append(jnp.full(x.shape[:-1] + (lo_w,), value, dtype=dtype))
        parts.append(x)
        if hi_w > 0:
            parts.append(jnp.full(x.shape[:-1] + (hi_w,), value, dtype=dtype))
        o_ref[interior_prefix + (slice(None),)] = jnp.concatenate(parts, axis=-1)
    else:
        # Non-fused interior copy (W strips were filled by the loop above).
        # TODO(synk): for bf16/int8 with odd H offsets, DMA the input tile
        # directly into the HBM interior window (memory_space=pl.ANY +
        # pltpu.make_async_copy) to avoid sublane repacking of packed rows.
        o_ref[interior_prefix + (slice(lo_w, lo_w + spatial_in[-1]),)] = x


def _vmem_capacity_bytes():
    """Physical VMEM capacity of the local TPU, with a conservative fallback."""
    try:
        info = pltpu.get_tpu_info()
        cap = getattr(info, "vmem_capacity_bytes", None)
        if cap:
            return int(cap)
    except Exception:
        pass
    return 64 << 20  # assume the smallest generation (v7x) if the query fails


def padsame_pallas(x, kernel_size, dilation=1, mode="constant", value=0,
                   *, force_pallas=False):
    ndim = x.ndim - 2
    if ndim not in (1, 2, 3):
        raise RuntimeError(
            f"Expected padding input to be 3,4 or 5 dimensional, but got {x.ndim}."
        )
    if mode != "constant":
        # TODO(synk): 'reflect'/'replicate'/'circular' need a
        # read-from-interior border strategy; not implemented in-kernel.
        raise NotImplementedError(f"mode={mode!r} not supported in Pallas kernel")

    if isinstance(dilation, int):
        dilation = (dilation,) * ndim
    if isinstance(kernel_size, int):
        kernel_size = (kernel_size,) * ndim
    dilation = tuple(dilation)
    kernel_size = tuple(kernel_size)
    if len(dilation) != ndim or len(kernel_size) != ndim:
        raise ValueError(
            f"kernel_size/dilation must have {ndim} entries, got "
            f"{kernel_size} / {dilation}"
        )

    total_pad = [d * (k - 1) for d, k in zip(dilation, kernel_size)]
    left = [tp // 2 for tp in total_pad]
    right = [tp - l for tp, l in zip(total_pad, left)]
    # F.pad pairs apply starting from the LAST tensor dim; reorder into the
    # tensor order of the spatial dims.
    pads = tuple((left[ndim - 1 - t], right[ndim - 1 - t]) for t in range(ndim))

    # Identity: no padding at all -> skip the HBM round trip entirely.
    if all(l == 0 and r == 0 for l, r in pads):
        return x

    N, C = x.shape[0], x.shape[1]
    spatial_in = tuple(x.shape[2:])
    spatial_out = tuple(s + l + r for s, (l, r) in zip(spatial_in, pads))
    out_shape = (N, C) + spatial_out

    dtype_bytes = jnp.dtype(x.dtype).itemsize
    in_elems = math.prod(spatial_in)
    out_elems = math.prod(spatial_out)
    bytes_per_nc = (in_elems + out_elems) * dtype_bytes   # one (n, c) slice
    out_bytes_total = N * C * out_elems * dtype_bytes

    def xla_pad():
        return jnp.pad(x, ((0, 0), (0, 0)) + pads, constant_values=value)

    # Dispatch to XLA's pad when the Pallas path cannot win:
    #   * lane-sparse output (padded last dim < 128 -> only masked stores), or
    #   * tiny problem where launch/grid overhead dominates.
    if not force_pallas and (spatial_out[-1] < 128
                             or out_bytes_total < (256 << 10)):
        return xla_pad()

    vmem_cap = _vmem_capacity_bytes()
    big_vmem = vmem_cap >= (100 << 20)            # v5e / v6e (128 MiB VMEM)
    tile_budget = (24 << 20) if big_vmem else (10 << 20)   # in+out bytes/step
    usable_vmem = vmem_cap - (8 << 20)            # leave compiler headroom

    # C is never split for 1-D spatial inputs (it is the second-to-last block
    # dim; full-dim blocks are always layout-legal), so the smallest block we
    # can emit covers the full channel extent there.
    min_block_bytes = bytes_per_nc * (C if ndim == 1 else 1)
    if 2 * min_block_bytes + (4 << 20) > usable_vmem:
        # TODO(synk): spatial-split path (block H in multiples of 8 with
        # program_id-aware border logic) instead of punting to XLA when a
        # single (n, c) slice cannot be double-buffered in VMEM.
        return xla_pad()

    # ---- (N, C) tiling: pack whole channels / samples up to tile_budget ----
    if ndim == 1:
        c_blk = C
    else:
        c_blk = max(1, min(C, tile_budget // bytes_per_nc))
    if c_blk < C:
        n_blk = 1
    else:
        n_blk = max(1, min(N, tile_budget // max(1, bytes_per_nc * C)))

    # Enforce enough grid steps for input/output DMA overlap and for both
    # TensorCores on v7x, as long as each tile stays >= ~1 MiB (the HBM
    # roofline is already ~flat there).
    MIN_STEPS, MIN_TILE_BYTES = 8, 1 << 20
    for _ in range(64):
        steps = (-(-N // n_blk)) * (-(-C // c_blk))
        if (steps >= MIN_STEPS
                or n_blk * c_blk * bytes_per_nc <= 2 * MIN_TILE_BYTES):
            break
        if n_blk > 1:
            n_blk = max(1, n_blk // 2)
        elif ndim >= 2 and c_blk > 1:
            c_blk = max(1, c_blk // 2)
        else:
            break

    # Ragged edges (N % n_blk, C % c_blk) are handled by Pallas via a
    # cdiv grid: OOB input lanes are garbage but only land in OOB output
    # positions, whose write-back is masked.
    grid = (pl.cdiv(N, n_blk), pl.cdiv(C, c_blk))
    in_block = (n_blk, c_blk) + spatial_in
    out_block = (n_blk, c_blk) + spatial_out

    def idx_map(i, j):
        return (i, j) + (0,) * ndim

    in_tile_bytes = n_blk * c_blk * in_elems * dtype_bytes
    out_tile_bytes = n_blk * c_blk * out_elems * dtype_bytes
    vmem_limit = 2 * (in_tile_bytes + out_tile_bytes) + (4 << 20)
    vmem_limit = int(min(max(vmem_limit, 16 << 20), usable_vmem))

    cost = pl.CostEstimate(
        flops=0,
        transcendentals=0,
        bytes_accessed=int(N * C * (in_elems + out_elems) * dtype_bytes),
    )

    def build(fuse_w):
        kernel = functools.partial(
            _pad_kernel, pads=pads, spatial_in=spatial_in, value=value,
            fuse_w=fuse_w)
        return pl.pallas_call(
            kernel,
            out_shape=jax.ShapeDtypeStruct(out_shape, x.dtype),
            grid=grid,
            in_specs=[pl.BlockSpec(in_block, idx_map)],
            out_specs=pl.BlockSpec(out_block, idx_map),
            compiler_params=pltpu.CompilerParams(
                dimension_semantics=("parallel", "parallel"),
                vmem_limit_bytes=vmem_limit,
            ),
            cost_estimate=cost,
        )

    try:
        return build(fuse_w=True)(x)
    except Exception:
        # Lane-fused row construction failed to lower/run on this toolchain;
        # fall back to the strip-fill + unaligned-interior-store kernel.
        return build(fuse_w=False)(x)


class PadSame:
    """Mirror of the PyTorch PadSame module (no parameters)."""

    def __init__(self, kernel_size, dilation=1, mode="constant", value=0):
        self.kernel_size = kernel_size
        self.dilation = dilation
        self.mode = mode
        self.value = value

    def __call__(self, x):
        return padsame_pallas(
            x, self.kernel_size, self.dilation, self.mode, self.value)


if __name__ == "__main__":
    key = jax.random.PRNGKey(0)

    # Case 1: symmetric kernel_size=3, dilation=1 -> pad 1 on every side.
    # Forced onto the Pallas path (W_out=18 < 128 would normally go to XLA).
    x = jax.random.normal(key, (2, 4, 16, 16), dtype=jnp.float32)
    y = jax.block_until_ready(
        padsame_pallas(x, kernel_size=3, dilation=1, value=0, force_pallas=True))
    ref = jnp.pad(x, ((0, 0), (0, 0), (1, 1), (1, 1)), constant_values=0)
    assert y.shape == (2, 4, 18, 18), y.shape
    assert jnp.array_equal(y, ref), "mismatch vs reference (symmetric case)"

    # Case 2: asymmetric kernel_size=(3, 4) checks the torch axis convention:
    # kernel_size[0] pads W (total 2 -> (1,1)), kernel_size[1] pads H (3 -> (1,2)).
    y2 = jax.block_until_ready(
        padsame_pallas(x, kernel_size=(3, 4), value=-1.5, force_pallas=True))
    ref2 = jnp.pad(x, ((0, 0), (0, 0), (1, 2), (1, 1)), constant_values=-1.5)
    assert y2.shape == (2, 4, 19, 18), y2.shape
    assert jnp.array_equal(y2, ref2), "mismatch vs reference (asymmetric case)"

    # Case 3: lane-dense shape (W_out >= 128, output > 256 KiB) takes the
    # Pallas path by default.
    x3 = jax.random.normal(jax.random.PRNGKey(0), (2, 8, 32, 128), dtype=jnp.float32)
    mod = PadSame(kernel_size=3, dilation=2)          # total pad 4 -> (2, 2) per dim
    y3 = jax.block_until_ready(mod(x3))
    ref3 = jnp.pad(x3, ((0, 0), (0, 0), (2, 2), (2, 2)), constant_values=0)
    assert y3.shape == (2, 8, 36, 132), y3.shape
    assert jnp.array_equal(y3, ref3), "mismatch vs reference (lane-dense case)"

    # Case 4: 1-D spatial (Conv1d-style) input; forced onto the Pallas path
    # (the small-problem dispatch would otherwise route it to XLA).
    x4 = jax.random.normal(jax.random.PRNGKey(0), (2, 8, 256), dtype=jnp.float32)
    y4 = jax.block_until_ready(
        padsame_pallas(x4, kernel_size=5, force_pallas=True))
    ref4 = jnp.pad(x4, ((0, 0), (0, 0), (2, 2)), constant_values=0)
    assert y4.shape == (2, 8, 260), y4.shape
    assert jnp.array_equal(y4, ref4), "mismatch vs reference (1-D case)"

    # Case 5: zero total padding -> identity early return (no kernel launch).
    y5 = padsame_pallas(x, kernel_size=1)
    assert y5 is x

    print("KERNEL_OK")
</pallas_src>

<mosaic_0001>
module attributes {stable_mosaic.version = 11 : i64} {
  func.func @_pad_kernel(%arg0: i32, %arg1: i32, %arg2: memref<2x4x16x16xf32, #tpu.memory_space<vmem>>, %arg3: memref<2x4x18x18xf32, #tpu.memory_space<vmem>>) attributes {dimension_semantics = [#tpu.dimension_semantics<parallel>, #tpu.dimension_semantics<parallel>], iteration_bounds = array<i64: 1, 1>, scalar_prefetch = 0 : i64, scratch_operands = 0 : i64, tpu.core_type = #tpu.core_type<tc>, window_params = [{transform_indices = @transform_0, window_bounds = array<i64: 2, 4, 16, 16>}, {transform_indices = @transform_1, window_bounds = array<i64: 2, 4, 18, 18>}]} {
    %cst = arith.constant 0.000000e+00 : f32
    %0 = vector.broadcast %cst : f32 to vector<2x4x1x18xf32>
    %c0 = arith.constant 0 : index
    %c0_0 = arith.constant 0 : index
    %c0_1 = arith.constant 0 : index
    %c0_2 = arith.constant 0 : index
    %1 = vector.load %arg3[%c0, %c0_0, %c0_1, %c0_2] : memref<2x4x18x18xf32, #tpu.memory_space<vmem>>, vector<2x4x1x18xf32>
    tpu.vector_store %arg3[%c0, %c0_0, %c0_1, %c0_2], %0 {strides = array<i32>} : memref<2x4x18x18xf32, #tpu.memory_space<vmem>>, vector<2x4x1x18xf32>,
    %cst_3 = arith.constant 0.000000e+00 : f32
    %2 = vector.broadcast %cst_3 : f32 to vector<2x4x1x18xf32>
    %c0_4 = arith.constant 0 : index
    %c0_5 = arith.constant 0 : index
    %c17 = arith.constant 17 : index
    %c0_6 = arith.constant 0 : index
    %3 = vector.load %arg3[%c0_4, %c0_5, %c17, %c0_6] : memref<2x4x18x18xf32, #tpu.memory_space<vmem>>, vector<2x4x1x18xf32>
    tpu.vector_store %arg3[%c0_4, %c0_5, %c17, %c0_6], %2 {strides = array<i32>} : memref<2x4x18x18xf32, #tpu.memory_space<vmem>>, vector<2x4x1x18xf32>,
    %c0_7 = arith.constant 0 : index
    %c0_8 = arith.constant 0 : index
    %c0_9 = arith.constant 0 : index
    %c0_10 = arith.constant 0 : index
    %4 = vector.load %arg2[%c0_7, %c0_8, %c0_9, %c0_10] : memref<2x4x16x16xf32, #tpu.memory_space<vmem>>, vector<2x4x16x16xf32>
    %cst_11 = arith.constant 0.000000e+00 : f32
    %5 = vector.broadcast %cst_11 : f32 to vector<2x4x16x1xf32>
    %cst_12 = arith.constant 0.000000e+00 : f32
    %6 = vector.broadcast %cst_12 : f32 to vector<2x4x16x1xf32>
    %7 = tpu.concatenate %5, %4, %6 in 3 : vector<2x4x16x1xf32>, vector<2x4x16x16xf32>, vector<2x4x16x1xf32> -> vector<2x4x16x18xf32>
    %c0_13 = arith.constant 0 : index
    %c0_14 = arith.constant 0 : index
    %c1 = arith.constant 1 : index
    %c0_15 = arith.constant 0 : index
    %8 = vector.load %arg3[%c0_13, %c0_14, %c1, %c0_15] : memref<2x4x18x18xf32, #tpu.memory_space<vmem>>, vector<2x4x16x18xf32>
    tpu.vector_store %arg3[%c0_13, %c0_14, %c1, %c0_15], %7 {strides = array<i32>} : memref<2x4x18x18xf32, #tpu.memory_space<vmem>>, vector<2x4x16x18xf32>,
    return
  }
  func.func @transform_0(%arg0: i32, %arg1: i32) -> (i32, i32, i32, i32) {
    %c0_i32 = arith.constant 0 : i32
    %c0_i32_0 = arith.constant 0 : i32
    %c0_i32_1 = arith.constant 0 : i32
    return %arg0, %arg1, %c0_i32, %c0_i32_0 : i32, i32, i32, i32
  }
  func.func @transform_1(%arg0: i32, %arg1: i32) -> (i32, i32, i32, i32) {
    %c0_i32 = arith.constant 0 : i32
    %c0_i32_0 = arith.constant 0 : i32
    %c0_i32_1 = arith.constant 0 : i32
    return %arg0, %arg1, %c0_i32, %c0_i32_0 : i32, i32, i32, i32
  }
}

module attributes {stable_mosaic.version = 11 : i64} {
  func.func @_pad_kernel(%arg0: i32, %arg1: i32, %arg2: memref<2x4x16x16xf32, #tpu.memory_space<vmem>>, %arg3: memref<2x4x18x18xf32, #tpu.memory_space<vmem>>) attributes {dimension_semantics = [#tpu.dimension_semantics<parallel>, #tpu.dimension_semantics<parallel>], iteration_bounds = array<i64: 1, 1>, scalar_prefetch = 0 : i64, scratch_operands = 0 : i64, tpu.core_type = #tpu.core_type<tc>, window_params = [{transform_indices = @transform_0, window_bounds = array<i64: 2, 4, 16, 16>}, {transform_indices = @transform_1, window_bounds = array<i64: 2, 4, 18, 18>}]} {
    %cst = arith.constant 0.000000e+00 : f32
    %0 = vector.broadcast %cst : f32 to vector<2x4x1x18xf32>
    %c0 = arith.constant 0 : index
    %c0_0 = arith.constant 0 : index
    %c0_1 = arith.constant 0 : index
    %c0_2 = arith.constant 0 : index
    %1 = vector.load %arg3[%c0, %c0_0, %c0_1, %c0_2] : memref<2x4x18x18xf32, #tpu.memory_space<vmem>>, vector<2x4x1x18xf32>
    tpu.vector_store %arg3[%c0, %c0_0, %c0_1, %c0_2], %0 {strides = array<i32>} : memref<2x4x18x18xf32, #tpu.memory_space<vmem>>, vector<2x4x1x18xf32>,
    %cst_3 = arith.constant 0.000000e+00 : f32
    %2 = vector.broadcast %cst_3 : f32 to vector<2x4x1x18xf32>
    %c0_4 = arith.constant 0 : index
    %c0_5 = arith.constant 0 : index
    %c17 = arith.constant 17 : index
    %c0_6 = arith.constant 0 : index
    %3 = vector.load %arg3[%c0_4, %c0_5, %c17, %c0_6] : memref<2x4x18x18xf32, #tpu.memory_space<vmem>>, vector<2x4x1x18xf32>
    tpu.vector_store %arg3[%c0_4, %c0_5, %c17, %c0_6], %2 {strides = array<i32>} : memref<2x4x18x18xf32, #tpu.memory_space<vmem>>, vector<2x4x1x18xf32>,
    %cst_7 = arith.constant 0.000000e+00 : f32
    %4 = vector.broadcast %cst_7 : f32 to vector<2x4x16x1xf32>
    %c0_8 = arith.constant 0 : index
    %c0_9 = arith.constant 0 : index
    %c1 = arith.constant 1 : index
    %c0_10 = arith.constant 0 : index
    %5 = vector.load %arg3[%c0_8, %c0_9, %c1, %c0_10] : memref<2x4x18x18xf32, #tpu.memory_space<vmem>>, vector<2x4x16x1xf32>
    tpu.vector_store %arg3[%c0_8, %c0_9, %c1, %c0_10], %4 {strides = array<i32>} : memref<2x4x18x18xf32, #tpu.memory_space<vmem>>, vector<2x4x16x1xf32>,
    %cst_11 = arith.constant 0.000000e+00 : f32
    %6 = vector.broadcast %cst_11 : f32 to vector<2x4x16x1xf32>
    %c0_12 = arith.constant 0 : index
    %c0_13 = arith.constant 0 : index
    %c1_14 = arith.constant 1 : index
    %c17_15 = arith.constant 17 : index
    %7 = vector.load %arg3[%c0_12, %c0_13, %c1_14, %c17_15] : memref<2x4x18x18xf32, #tpu.memory_space<vmem>>, vector<2x4x16x1xf32>
    tpu.vector_store %arg3[%c0_12, %c0_13, %c1_14, %c17_15], %6 {strides = array<i32>} : memref<2x4x18x18xf32, #tpu.memory_space<vmem>>, vector<2x4x16x1xf32>,
    %c0_16 = arith.constant 0 : index
    %c0_17 = arith.constant 0 : index
    %c0_18 = arith.constant 0 : index
    %c0_19 = arith.constant 0 : index
    %8 = vector.load %arg2[%c0_16, %c0_17, %c0_18, %c0_19] : memref<2x4x16x16xf32, #tpu.memory_space<vmem>>, vector<2x4x16x16xf32>
    %c0_20 = arith.constant 0 : index
    %c0_21 = arith.constant 0 : index
    %c1_22 = arith.constant 1 : index
    %c1_23 = arith.constant 1 : index
    %9 = vector.load %arg3[%c0_20, %c0_21, %c1_22, %c1_23] : memref<2x4x18x18xf32, #tpu.memory_space<vmem>>, vector<2x4x16x16xf32>
    tpu.vector_store %arg3[%c0_20, %c0_21, %c1_22, %c1_23], %8 {strides = array<i32>} : memref<2x4x18x18xf32, #tpu.memory_space<vmem>>, vector<2x4x16x16xf32>,
    return
  }
  func.func @transform_0(%arg0: i32, %arg1: i32) -> (i32, i32, i32, i32) {
    %c0_i32 = arith.constant 0 : i32
    %c0_i32_0 = arith.constant 0 : i32
    %c0_i32_1 = arith.constant 0 : i32
    return %arg0, %arg1, %c0_i32, %c0_i32_0 : i32, i32, i32, i32
  }
  func.func @transform_1(%arg0: i32, %arg1: i32) -> (i32, i32, i32, i32) {
    %c0_i32 = arith.constant 0 : i32
    %c0_i32_0 = arith.constant 0 : i32
    %c0_i32_1 = arith.constant 0 : i32
    return %arg0, %arg1, %c0_i32, %c0_i32_0 : i32, i32, i32, i32
  }
}

</mosaic_0001>

<llo_original>
// kernel: tpu_custom_call.1
$region0: #{tpu_custom_call.1}
  #allocation0 [shape = 'u32[]', space=smem, size = 0x4, offset = 0x4, fixed_abs, tag = 'smem constant byte address 0x4 - core index']
  #allocation1 [shape = 'u32[144,128]{1,0:T(1,128)}', space=vmem, size = 0x12000, scoped, tag = 'internal scratch']
  %s0 = inlined_call_operand.hbm [shape: f32[2,4,16,16], index: 0, kind: input, shape index: {}]
  %s1 = inlined_call_operand.vmem [shape: f32[2,4,18,18], index: 1, kind: output, shape index: {}]
  %s2 = sld [smem:[#allocation0]]
  $region18: #{tpu_custom_call.1} parent=0
    _
  %s4 = ssub.s32 1, %s2
  %s5 = scalar_select 0, %s4, %s2
  $region1: #{tpu_custom_call.1} parent=0
    #allocation2 [shape = 'u8[65536]{0}', space=vmem, size = 0x10000, scoped, tag = 'input window, operand 0, single buffered']
    #allocation3 [shape = 's32[1]{0}', space=sflag, size = 0x4, scoped, tag = 'scoped memory for tpu_custom_call.1']
    %6 = vsyncpa [#allocation3], 0
    // Predicated region
    $region2: #{tpu_custom_call.1} parent=1 // pred_check
      _
    $region3: #{tpu_custom_call.1} parent=1 // pred_check_branch
      %8 = sbr.rel (0) target = $region5
    $region4: #{tpu_custom_call.1} parent=1 // pred_region
      %s10 = ssub.s32 2048, 2048
      %11 = vsyncadd [#allocation3], %s10
      %s12 = sshll.u32 [#allocation2], 4
      %s13 = int_to_ptr.vmem [resolvable:$true] %s12
      %18 = dma.hbm_to_vmem [thread:$0]  %s0, 2048, %s13, [#allocation3], 128, 128, 8
    $region5: #{tpu_custom_call.1} parent=1 // pred_fallthru
      _
    // Predicated region
    $region6: #{tpu_custom_call.1} parent=1 // pred_check
      _
    $region7: #{tpu_custom_call.1} parent=1 // pred_check_branch
      %20 = sbr.rel (0) target = $region9
    $region8: #{tpu_custom_call.1} parent=1 // pred_region
      %21 = dma.done [#allocation3], 2048
    $region9: #{tpu_custom_call.1} parent=1 // pred_fallthru
      _
    %vm22 = vcmask 139264
    %23 = vst.msk [vmem:[%s1] sm:$0x1] %vm22, 0.0
    %24 = vst.msk [vmem:[%s1 + $0x18] sm:$0x1] %vm22, 0.0
    %25 = vst.msk [vmem:[%s1 + $0x30] sm:$0x1] %vm22, 0.0
    %26 = vst.msk [vmem:[%s1 + $0x48] sm:$0x1] %vm22, 0.0
    %27 = vst.msk [vmem:[%s1 + $0x60] sm:$0x1] %vm22, 0.0
    %28 = vst.msk [vmem:[%s1 + $0x78] sm:$0x1] %vm22, 0.0
    %29 = vst.msk [vmem:[%s1 + $0x90] sm:$0x1] %vm22, 0.0
    %30 = vst.msk [vmem:[%s1 + $0xa8] sm:$0x1] %vm22, 0.0
    %31 = vst.msk [vmem:[%s1 + $0x11] sm:$0x1] %vm22, 0.0
    %32 = vst.msk [vmem:[%s1 + $0x29] sm:$0x1] %vm22, 0.0
    %33 = vst.msk [vmem:[%s1 + $0x41] sm:$0x1] %vm22, 0.0
    %34 = vst.msk [vmem:[%s1 + $0x59] sm:$0x1] %vm22, 0.0
    %35 = vst.msk [vmem:[%s1 + $0x71] sm:$0x1] %vm22, 0.0
    %36 = vst.msk [vmem:[%s1 + $0x89] sm:$0x1] %vm22, 0.0
    %37 = vst.msk [vmem:[%s1 + $0xa1] sm:$0x1] %vm22, 0.0
    %38 = vst.msk [vmem:[%s1 + $0xb9] sm:$0x1] %vm22, 0.0
    %v39 = vld [vmem:[#allocation2] sm:$0xff]
    %v40 = vld [vmem:[#allocation2 + $0x8] sm:$0xff]
    %v41 = vld [vmem:[#allocation2 + $0x10] sm:$0xff]
    %v42 = vld [vmem:[#allocation2 + $0x18] sm:$0xff]
    %v43 = vld [vmem:[#allocation2 + $0x20] sm:$0xff]
    %v44 = vld [vmem:[#allocation2 + $0x28] sm:$0xff]
    %v45 = vld [vmem:[#allocation2 + $0x30] sm:$0xff]
    %v46 = vld [vmem:[#allocation2 + $0x38] sm:$0xff]
    %v47 = vld [vmem:[#allocation2 + $0x40] sm:$0xff]
    %v48 = vld [vmem:[#allocation2 + $0x48] sm:$0xff]
    %v49 = vld [vmem:[#allocation2 + $0x50] sm:$0xff]
    %v50 = vld [vmem:[#allocation2 + $0x58] sm:$0xff]
    %v51 = vld [vmem:[#allocation2 + $0x60] sm:$0xff]
    %v52 = vld [vmem:[#allocation2 + $0x68] sm:$0xff]
    %v53 = vld [vmem:[#allocation2 + $0x70] sm:$0xff]
    %v54 = vld [vmem:[#allocation2 + $0x78] sm:$0xff]
    %71 = vrot.lane.b32.xlu0 %v39, 1
    %v72 = vpop.permute.xlu0 %71
    %73 = vrot.lane.b32.xlu0 %v40, 1
    %v74 = vpop.permute.xlu0 %73
    %75 = vrot.lane.b32.xlu0 %v41, 1
    %v76 = vpop.permute.xlu0 %75
    %77 = vrot.lane.b32.xlu0 %v42, 1
    %v78 = vpop.permute.xlu0 %77
    %79 = vrot.lane.b32.xlu0 %v43, 1
    %v80 = vpop.permute.xlu0 %79
    %81 = vrot.lane.b32.xlu0 %v44, 1
    %v82 = vpop.permute.xlu0 %81
    %83 = vrot.lane.b32.xlu0 %v45, 1
    %v84 = vpop.permute.xlu0 %83
    %85 = vrot.lane.b32.xlu0 %v46, 1
    %v86 = vpop.permute.xlu0 %85
    %87 = vrot.lane.b32.xlu0 %v47, 1
    %v88 = vpop.permute.xlu0 %87
    %89 = vrot.lane.b32.xlu0 %v48, 1
    %v90 = vpop.permute.xlu0 %89
    %91 = vrot.lane.b32.xlu0 %v49, 1
    %v92 = vpop.permute.xlu0 %91
    %93 = vrot.lane.b32.xlu0 %v50, 1
    %v94 = vpop.permute.xlu0 %93
    %95 = vrot.lane.b32.xlu0 %v51, 1
    %v96 = vpop.permute.xlu0 %95
    %97 = vrot.lane.b32.xlu0 %v52, 1
    %v98 = vpop.permute.xlu0 %97
    %99 = vrot.lane.b32.xlu0 %v53, 1
    %v100 = vpop.permute.xlu0 %99
    %101 = vrot.lane.b32.xlu0 %v54, 1
    %v102 = vpop.permute.xlu0 %101
    %vm119 = vcmask 7168
    %v120 = vsel %vm119, 0.0, %v72
    %v121 = vsel %vm119, 0.0, %v74
    %v122 = vsel %vm119, 0.0, %v76
    %v123 = vsel %vm119, 0.0, %v78
    %v124 = vsel %vm119, 0.0, %v80
    %v125 = vsel %vm119, 0.0, %v82
    %v126 = vsel %vm119, 0.0, %v84
    %v127 = vsel %vm119, 0.0, %v86
    %v128 = vsel %vm119, 0.0, %v88
    %v129 = vsel %vm119, 0.0, %v90
    %v130 = vsel %vm119, 0.0, %v92
    %v131 = vsel %vm119, 0.0, %v94
    %v132 = vsel %vm119, 0.0, %v96
    %v133 = vsel %vm119, 0.0, %v98
    %v134 = vsel %vm119, 0.0, %v100
    %v135 = vsel %vm119, 0.0, %v102
    %vm136 = vcmask 138240
    %v137 = vsel %vm136, %v120, 0.0
    %v138 = vsel %vm136, %v121, 0.0
    %v139 = vsel %vm136, %v122, 0.0
    %v140 = vsel %vm136, %v123, 0.0
    %v141 = vsel %vm136, %v124, 0.0
    %v142 = vsel %vm136, %v125, 0.0
    %v143 = vsel %vm136, %v126, 0.0
    %v144 = vsel %vm136, %v127, 0.0
    %v145 = vsel %vm136, %v128, 0.0
    %v146 = vsel %vm136, %v129, 0.0
    %v147 = vsel %vm136, %v130, 0.0
    %v148 = vsel %vm136, %v131, 0.0
    %v149 = vsel %vm136, %v132, 0.0
    %v150 = vsel %vm136, %v133, 0.0
    %v151 = vsel %vm136, %v134, 0.0
    %v152 = vsel %vm136, %v135, 0.0
    %vm153 = vcmask 146432
    %154 = vst.msk [vmem:[%s1 + $0x1] sm:$0xff] %vm153, %v137
    %155 = vst.msk [vmem:[%s1 + $0x9] sm:$0xff] %vm153, %v138
    %156 = vst.msk [vmem:[%s1 + $0x19] sm:$0xff] %vm153, %v139
    %157 = vst.msk [vmem:[%s1 + $0x21] sm:$0xff] %vm153, %v140
    %158 = vst.msk [vmem:[%s1 + $0x31] sm:$0xff] %vm153, %v141
    %159 = vst.msk [vmem:[%s1 + $0x39] sm:$0xff] %vm153, %v142
    %160 = vst.msk [vmem:[%s1 + $0x49] sm:$0xff] %vm153, %v143
    %161 = vst.msk [vmem:[%s1 + $0x51] sm:$0xff] %vm153, %v144
    %162 = vst.msk [vmem:[%s1 + $0x61] sm:$0xff] %vm153, %v145
    %163 = vst.msk [vmem:[%s1 + $0x69] sm:$0xff] %vm153, %v146
    %164 = vst.msk [vmem:[%s1 + $0x79] sm:$0xff] %vm153, %v147
    %165 = vst.msk [vmem:[%s1 + $0x81] sm:$0xff] %vm153, %v148
    %166 = vst.msk [vmem:[%s1 + $0x91] sm:$0xff] %vm153, %v149
    %167 = vst.msk [vmem:[%s1 + $0x99] sm:$0xff] %vm153, %v150
    %168 = vst.msk [vmem:[%s1 + $0xa9] sm:$0xff] %vm153, %v151
    %169 = vst.msk [vmem:[%s1 + $0xb1] sm:$0xff] %vm153, %v152
    // Predicated region
    $region10: #{tpu_custom_call.1} parent=1 // pred_check
      _
    $region11: #{tpu_custom_call.1} parent=1 // pred_check_branch
      %171 = sbr.rel (0) target = $region13
    $region12: #{tpu_custom_call.1} parent=1 // pred_region
      _
    $region13: #{tpu_custom_call.1} parent=1 // pred_fallthru
      _
    // Predicated region
    $region14: #{tpu_custom_call.1} parent=1 // pred_check
      _
    $region15: #{tpu_custom_call.1} parent=1 // pred_check_branch
      %173 = sbr.rel (0) target = $region17
    $region16: #{tpu_custom_call.1} parent=1 // pred_region
      _
    $region17: #{tpu_custom_call.1} parent=1 // pred_fallthru
      _
    %174 = vsyncpa [#allocation3], 1

// kernel: tpu_custom_call.1
$region0: #{tpu_custom_call.1}
  #allocation0 [shape = 'u32[]', space=smem, size = 0x4, offset = 0x4, fixed_abs, tag = 'smem constant byte address 0x4 - core index']
  #allocation1 [shape = 'u32[144,128]{1,0:T(1,128)}', space=vmem, size = 0x12000, scoped, tag = 'internal scratch']
  %s0 = inlined_call_operand.hbm [shape: f32[2,4,16,16], index: 0, kind: input, shape index: {}]
  %s1 = inlined_call_operand.vmem [shape: f32[2,4,18,18], index: 1, kind: output, shape index: {}]
  %s2 = sld [smem:[#allocation0]]
  $region18: #{tpu_custom_call.1} parent=0
    _
  %s4 = ssub.s32 1, %s2
  %s5 = scalar_select 0, %s4, %s2
  $region1: #{tpu_custom_call.1} parent=0
    #allocation2 [shape = 'u8[65536]{0}', space=vmem, size = 0x10000, scoped, tag = 'input window, operand 0, single buffered']
    #allocation3 [shape = 's32[1]{0}', space=sflag, size = 0x4, scoped, tag = 'scoped memory for tpu_custom_call.1']
    %6 = vsyncpa [#allocation3], 0
    // Predicated region
    $region2: #{tpu_custom_call.1} parent=1 // pred_check
      _
    $region3: #{tpu_custom_call.1} parent=1 // pred_check_branch
      %8 = sbr.rel (0) target = $region5
    $region4: #{tpu_custom_call.1} parent=1 // pred_region
      %s10 = ssub.s32 2048, 2048
      %11 = vsyncadd [#allocation3], %s10
      %s12 = sshll.u32 [#allocation2], 4
      %s13 = int_to_ptr.vmem [resolvable:$true] %s12
      %18 = dma.hbm_to_vmem [thread:$0]  %s0, 2048, %s13, [#allocation3], 128, 128, 8
    $region5: #{tpu_custom_call.1} parent=1 // pred_fallthru
      _
    // Predicated region
    $region6: #{tpu_custom_call.1} parent=1 // pred_check
      _
    $region7: #{tpu_custom_call.1} parent=1 // pred_check_branch
      %20 = sbr.rel (0) target = $region9
    $region8: #{tpu_custom_call.1} parent=1 // pred_region
      %21 = dma.done [#allocation3], 2048
    $region9: #{tpu_custom_call.1} parent=1 // pred_fallthru
      _
    %vm22 = vcmask 139264
    %23 = vst.msk [vmem:[%s1] sm:$0x1] %vm22, 0.0
    %24 = vst.msk [vmem:[%s1 + $0x18] sm:$0x1] %vm22, 0.0
    %25 = vst.msk [vmem:[%s1 + $0x30] sm:$0x1] %vm22, 0.0
    %26 = vst.msk [vmem:[%s1 + $0x48] sm:$0x1] %vm22, 0.0
    %27 = vst.msk [vmem:[%s1 + $0x60] sm:$0x1] %vm22, 0.0
    %28 = vst.msk [vmem:[%s1 + $0x78] sm:$0x1] %vm22, 0.0
    %29 = vst.msk [vmem:[%s1 + $0x90] sm:$0x1] %vm22, 0.0
    %30 = vst.msk [vmem:[%s1 + $0xa8] sm:$0x1] %vm22, 0.0
    %31 = vst.msk [vmem:[%s1 + $0x11] sm:$0x1] %vm22, 0.0
    %32 = vst.msk [vmem:[%s1 + $0x29] sm:$0x1] %vm22, 0.0
    %33 = vst.msk [vmem:[%s1 + $0x41] sm:$0x1] %vm22, 0.0
    %34 = vst.msk [vmem:[%s1 + $0x59] sm:$0x1] %vm22, 0.0
    %35 = vst.msk [vmem:[%s1 + $0x71] sm:$0x1] %vm22, 0.0
    %36 = vst.msk [vmem:[%s1 + $0x89] sm:$0x1] %vm22, 0.0
    %37 = vst.msk [vmem:[%s1 + $0xa1] sm:$0x1] %vm22, 0.0
    %38 = vst.msk [vmem:[%s1 + $0xb9] sm:$0x1] %vm22, 0.0
    %vm39 = vcmask 7168
    %40 = vst.msk [vmem:[%s1 + $0x1] sm:$0xff] %vm39, 0.0
    %41 = vst.msk [vmem:[%s1 + $0x9] sm:$0xff] %vm39, 0.0
    %42 = vst.msk [vmem:[%s1 + $0x19] sm:$0xff] %vm39, 0.0
    %43 = vst.msk [vmem:[%s1 + $0x21] sm:$0xff] %vm39, 0.0
    %44 = vst.msk [vmem:[%s1 + $0x31] sm:$0xff] %vm39, 0.0
    %45 = vst.msk [vmem:[%s1 + $0x39] sm:$0xff] %vm39, 0.0
    %46 = vst.msk [vmem:[%s1 + $0x49] sm:$0xff] %vm39, 0.0
    %47 = vst.msk [vmem:[%s1 + $0x51] sm:$0xff] %vm39, 0.0
    %48 = vst.msk [vmem:[%s1 + $0x61] sm:$0xff] %vm39, 0.0
    %49 = vst.msk [vmem:[%s1 + $0x69] sm:$0xff] %vm39, 0.0
    %50 = vst.msk [vmem:[%s1 + $0x79] sm:$0xff] %vm39, 0.0
    %51 = vst.msk [vmem:[%s1 + $0x81] sm:$0xff] %vm39, 0.0
    %52 = vst.msk [vmem:[%s1 + $0x91] sm:$0xff] %vm39, 0.0
    %53 = vst.msk [vmem:[%s1 + $0x99] sm:$0xff] %vm39, 0.0
    %54 = vst.msk [vmem:[%s1 + $0xa9] sm:$0xff] %vm39, 0.0
    %55 = vst.msk [vmem:[%s1 + $0xb1] sm:$0xff] %vm39, 0.0
    %vm56 = vcmask 146568
    %57 = vst.msk [vmem:[%s1 + $0x1] sm:$0xff] %vm56, 0.0
    %58 = vst.msk [vmem:[%s1 + $0x9] sm:$0xff] %vm56, 0.0
    %59 = vst.msk [vmem:[%s1 + $0x19] sm:$0xff] %vm56, 0.0
    %60 = vst.msk [vmem:[%s1 + $0x21] sm:$0xff] %vm56, 0.0
    %61 = vst.msk [vmem:[%s1 + $0x31] sm:$0xff] %vm56, 0.0
    %62 = vst.msk [vmem:[%s1 + $0x39] sm:$0xff] %vm56, 0.0
    %63 = vst.msk [vmem:[%s1 + $0x49] sm:$0xff] %vm56, 0.0
    %64 = vst.msk [vmem:[%s1 + $0x51] sm:$0xff] %vm56, 0.0
    %65 = vst.msk [vmem:[%s1 + $0x61] sm:$0xff] %vm56, 0.0
    %66 = vst.msk [vmem:[%s1 + $0x69] sm:$0xff] %vm56, 0.0
    %67 = vst.msk [vmem:[%s1 + $0x79] sm:$0xff] %vm56, 0.0
    %68 = vst.msk [vmem:[%s1 + $0x81] sm:$0xff] %vm56, 0.0
    %69 = vst.msk [vmem:[%s1 + $0x91] sm:$0xff] %vm56, 0.0
    %70 = vst.msk [vmem:[%s1 + $0x99] sm:$0xff] %vm56, 0.0
    %71 = vst.msk [vmem:[%s1 + $0xa9] sm:$0xff] %vm56, 0.0
    %72 = vst.msk [vmem:[%s1 + $0xb1] sm:$0xff] %vm56, 0.0
    %v73 = vld [vmem:[#allocation2] sm:$0xff]
    %v74 = vld [vmem:[#allocation2 + $0x8] sm:$0xff]
    %v75 = vld [vmem:[#allocation2 + $0x10] sm:$0xff]
    %v76 = vld [vmem:[#allocation2 + $0x18] sm:$0xff]
    %v77 = vld [vmem:[#allocation2 + $0x20] sm:$0xff]
    %v78 = vld [vmem:[#allocation2 + $0x28] sm:$0xff]
    %v79 = vld [vmem:[#allocation2 + $0x30] sm:$0xff]
    %v80 = vld [vmem:[#allocation2 + $0x38] sm:$0xff]
    %v81 = vld [vmem:[#allocation2 + $0x40] sm:$0xff]
    %v82 = vld [vmem:[#allocation2 + $0x48] sm:$0xff]
    %v83 = vld [vmem:[#allocation2 + $0x50] sm:$0xff]
    %v84 = vld [vmem:[#allocation2 + $0x58] sm:$0xff]
    %v85 = vld [vmem:[#allocation2 + $0x60] sm:$0xff]
    %v86 = vld [vmem:[#allocation2 + $0x68] sm:$0xff]
    %v87 = vld [vmem:[#allocation2 + $0x70] sm:$0xff]
    %v88 = vld [vmem:[#allocation2 + $0x78] sm:$0xff]
    %105 = vrot.lane.b32.xlu0 %v73, 1
    %v106 = vpop.permute.xlu0 %105
    %107 = vrot.lane.b32.xlu0 %v74, 1
    %v108 = vpop.permute.xlu0 %107
    %109 = vrot.lane.b32.xlu0 %v75, 1
    %v110 = vpop.permute.xlu0 %109
    %111 = vrot.lane.b32.xlu0 %v76, 1
    %v112 = vpop.permute.xlu0 %111
    %113 = vrot.lane.b32.xlu0 %v77, 1
    %v114 = vpop.permute.xlu0 %113
    %115 = vrot.lane.b32.xlu0 %v78, 1
    %v116 = vpop.permute.xlu0 %115
    %117 = vrot.lane.b32.xlu0 %v79, 1
    %v118 = vpop.permute.xlu0 %117
    %119 = vrot.lane.b32.xlu0 %v80, 1
    %v120 = vpop.permute.xlu0 %119
    %121 = vrot.lane.b32.xlu0 %v81, 1
    %v122 = vpop.permute.xlu0 %121
    %123 = vrot.lane.b32.xlu0 %v82, 1
    %v124 = vpop.permute.xlu0 %123
    %125 = vrot.lane.b32.xlu0 %v83, 1
    %v126 = vpop.permute.xlu0 %125
    %127 = vrot.lane.b32.xlu0 %v84, 1
    %v128 = vpop.permute.xlu0 %127
    %129 = vrot.lane.b32.xlu0 %v85, 1
    %v130 = vpop.permute.xlu0 %129
    %131 = vrot.lane.b32.xlu0 %v86, 1
    %v132 = vpop.permute.xlu0 %131
    %133 = vrot.lane.b32.xlu0 %v87, 1
    %v134 = vpop.permute.xlu0 %133
    %135 = vrot.lane.b32.xlu0 %v88, 1
    %v136 = vpop.permute.xlu0 %135
    %vm153 = vcmask 138248
    %154 = vst.msk [vmem:[%s1 + $0x1] sm:$0xff] %vm153, %v106
    %155 = vst.msk [vmem:[%s1 + $0x9] sm:$0xff] %vm153, %v108
    %156 = vst.msk [vmem:[%s1 + $0x19] sm:$0xff] %vm153, %v110
    %157 = vst.msk [vmem:[%s1 + $0x21] sm:$0xff] %vm153, %v112
    %158 = vst.msk [vmem:[%s1 + $0x31] sm:$0xff] %vm153, %v114
    %159 = vst.msk [vmem:[%s1 + $0x39] sm:$0xff] %vm153, %v116
    %160 = vst.msk [vmem:[%s1 + $0x49] sm:$0xff] %vm153, %v118
    %161 = vst.msk [vmem:[%s1 + $0x51] sm:$0xff] %vm153, %v120
    %162 = vst.msk [vmem:[%s1 + $0x61] sm:$0xff] %vm153, %v122
    %163 = vst.msk [vmem:[%s1 + $0x69] sm:$0xff] %vm153, %v124
    %164 = vst.msk [vmem:[%s1 + $0x79] sm:$0xff] %vm153, %v126
    %165 = vst.msk [vmem:[%s1 + $0x81] sm:$0xff] %vm153, %v128
    %166 = vst.msk [vmem:[%s1 + $0x91] sm:$0xff] %vm153, %v130
    %167 = vst.msk [vmem:[%s1 + $0x99] sm:$0xff] %vm153, %v132
    %168 = vst.msk [vmem:[%s1 + $0xa9] sm:$0xff] %vm153, %v134
    %169 = vst.msk [vmem:[%s1 + $0xb1] sm:$0xff] %vm153, %v136
    // Predicated region
    $region10: #{tpu_custom_call.1} parent=1 // pred_check
      _
    $region11: #{tpu_custom_call.1} parent=1 // pred_check_branch
      %171 = sbr.rel (0) target = $region13
    $region12: #{tpu_custom_call.1} parent=1 // pred_region
      _
    $region13: #{tpu_custom_call.1} parent=1 // pred_fallthru
      _
    // Predicated region
    $region14: #{tpu_custom_call.1} parent=1 // pred_check
      _
    $region15: #{tpu_custom_call.1} parent=1 // pred_check_branch
      %173 = sbr.rel (0) target = $region17
    $region16: #{tpu_custom_call.1} parent=1 // pred_region
      _
    $region17: #{tpu_custom_call.1} parent=1 // pred_fallthru
      _
    %174 = vsyncpa [#allocation3], 1

</llo_original>
